<compile_context>
chip_gen: v7x
topology: tpu7x:2x2x1
jax: 0.10.0
libtpu: 0.0.40
codegen_flags: <defaults>
</compile_context>

<pallas_src>
import functools

import jax
import jax.numpy as jnp
from jax import lax
from jax.experimental import pallas as pl
from jax.experimental.pallas import tpu as pltpu


def _mlp_kernel(x_ref, wg_ref, o_ref):
    """One grid step == one batch tile x one group of G fused layers.

    x_ref : (tm, F)    f32 input activations (consumed only at layer-group 0)
    wg_ref: (G, F, F)  bf16 pre-transposed weights (W_l.T) for this group
    o_ref : (tm, F)    f32 output block; doubles as the resident running
                       activation across the (last) layer-group grid axis.
    """
    step = pl.program_id(1)  # layer-group index (must be the LAST grid axis)

    @pl.when(step == 0)
    def _():
        o_ref[...] = x_ref[...]

    act = o_ref[...]  # f32 running activation
    num_layers_in_group = wg_ref.shape[0]

    def one_layer(i, a):
        # bf16 x bf16 MXU matmul with f32 accumulation, ReLU in f32.
        y = jnp.dot(a.astype(jnp.bfloat16), wg_ref[i],
                    preferred_element_type=jnp.float32)
        return jnp.maximum(y, 0.0)  # torch.relu

    act = lax.fori_loop(0, num_layers_in_group, one_layer, act, unroll=True)
    o_ref[...] = act


@functools.partial(jax.jit, static_argnames=("block_batch", "layers_per_step"))
def mlp_forward(x, weights_t, *, block_batch=8, layers_per_step=2):
    """x: (B, F) float32; weights_t: (L, F, F) where weights_t[l] = W_l.T."""
    B, F = x.shape
    L = weights_t.shape[0]

    tm = min(block_batch, B)
    G = min(layers_per_step, L)
    assert B % tm == 0, "batch must be divisible by block_batch"
    assert L % G == 0, "layers must be divisible by layers_per_step"
    assert tm % 8 == 0 or tm == B, "batch tile must be sublane-aligned"

    weights_t = weights_t.astype(jnp.bfloat16)

    # VMEM budget: double-buffered x / weight / out blocks, plus headroom.
    block_bytes = 2 * (tm * F * 4) + 2 * (G * F * F * 2) + 2 * (tm * F * 4)
    vmem_limit = int(min(max(4 * block_bytes, 4 << 20), 48 << 20))

    return pl.pallas_call(
        _mlp_kernel,
        out_shape=jax.ShapeDtypeStruct((B, F), jnp.float32),
        grid_spec=pltpu.PrefetchScalarGridSpec(
            num_scalar_prefetch=0,
            # Layer axis last -> output block resident across all layer steps
            # of a given batch tile, written back to HBM once per batch tile.
            grid=(B // tm, L // G),
            in_specs=[
                pl.BlockSpec((tm, F), lambda i, s: (i, 0)),       # x tile
                pl.BlockSpec((G, F, F), lambda i, s: (s, 0, 0)),  # weight group
            ],
            out_specs=pl.BlockSpec((tm, F), lambda i, s: (i, 0)),
        ),
        compiler_params=pltpu.CompilerParams(
            dimension_semantics=("parallel", "arbitrary"),
            vmem_limit_bytes=vmem_limit,
        ),
    )(x, weights_t)


def make_params(key, neural_num, layers):
    """Kaiming-normal init matching nn.init.kaiming_normal_ (fan_in mode,
    gain=sqrt(2)): std = sqrt(2 / fan_in). Returns bf16 W.T stack (L, F, F)."""
    std = (2.0 / neural_num) ** 0.5
    keys = jax.random.split(key, layers)
    # torch Linear weight is (out, in); we store W.T = (in, out) per layer.
    ws = [std * jax.random.normal(k, (neural_num, neural_num), jnp.float32)
          for k in keys]
    weights_t = jnp.stack([w.T for w in ws], axis=0)
    return weights_t.astype(jnp.bfloat16)


def mlp_reference(x, weights_t_bf16):
    """Pure-JAX reference mirroring the kernel's precision policy."""
    act = x.astype(jnp.float32)
    for l in range(weights_t_bf16.shape[0]):
        y = jnp.dot(act.astype(jnp.bfloat16), weights_t_bf16[l],
                    preferred_element_type=jnp.float32)
        act = jnp.maximum(y, 0.0)
    return act


if __name__ == "__main__":
    neural_num = 128   # features (lane-aligned)
    layers = 4
    batch = 16         # two sublane-aligned batch tiles of 8

    key = jax.random.PRNGKey(0)
    k_w, k_x = jax.random.split(key)
    weights_t = make_params(k_w, neural_num, layers)           # (L, F, F) bf16
    x = jax.random.normal(k_x, (batch, neural_num), jnp.float32)

    out = mlp_forward(x, weights_t, block_batch=8, layers_per_step=2)
    out = jax.block_until_ready(out)

    ref = mlp_reference(x, weights_t)
    assert out.shape == (batch, neural_num)
    assert out.dtype == jnp.float32
    assert jnp.allclose(out, ref, atol=2e-3, rtol=2e-3), "mismatch vs reference"

    print("KERNEL_OK")
</pallas_src>

<mosaic_0001>
module attributes {stable_mosaic.version = 11 : i64} {
  func.func @_mlp_kernel(%arg0: i32, %arg1: i32, %arg2: memref<8x128xf32, #tpu.memory_space<vmem>>, %arg3: memref<2x128x128xbf16, #tpu.memory_space<vmem>>, %arg4: memref<8x128xf32, #tpu.memory_space<vmem>>) attributes {dimension_semantics = [#tpu.dimension_semantics<parallel>, #tpu.dimension_semantics<arbitrary>], iteration_bounds = array<i64: 2, 2>, scalar_prefetch = 0 : i64, scratch_operands = 0 : i64, tpu.core_type = #tpu.core_type<tc>, window_params = [{transform_indices = @transform_0, window_bounds = array<i64: 8, 128>}, {transform_indices = @transform_1, window_bounds = array<i64: 2, 128, 128>}, {transform_indices = @transform_2, window_bounds = array<i64: 8, 128>}]} {
    %c0_i32 = arith.constant 0 : i32
    %0 = arith.cmpi eq, %arg1, %c0_i32 : i32
    %1 = arith.extui %0 : i1 to i32
    %c0_i32_0 = arith.constant 0 : i32
    %2 = arith.cmpi ne, %1, %c0_i32_0 : i32
    scf.if %2 {
      %c0_12 = arith.constant 0 : index
      %c0_13 = arith.constant 0 : index
      %19 = vector.load %arg2[%c0_12, %c0_13] : memref<8x128xf32, #tpu.memory_space<vmem>>, vector<8x128xf32>
      %c0_14 = arith.constant 0 : index
      %c0_15 = arith.constant 0 : index
      %20 = vector.load %arg4[%c0_14, %c0_15] : memref<8x128xf32, #tpu.memory_space<vmem>>, vector<8x128xf32>
      tpu.vector_store %arg4[%c0_14, %c0_15], %19 {strides = array<i32>} : memref<8x128xf32, #tpu.memory_space<vmem>>, vector<8x128xf32>,
    } else {
    }
    %c0 = arith.constant 0 : index
    %c0_1 = arith.constant 0 : index
    %3 = vector.load %arg4[%c0, %c0_1] : memref<8x128xf32, #tpu.memory_space<vmem>>, vector<8x128xf32>
    %c0_i32_2 = arith.constant 0 : i32
    %4 = arith.truncf %3 : vector<8x128xf32> to vector<8x128xbf16>
    %5 = arith.index_cast %c0_i32_2 : i32 to index
    %c0_3 = arith.constant 0 : index
    %c0_4 = arith.constant 0 : index
    %6 = vector.load %arg3[%5, %c0_3, %c0_4] : memref<2x128x128xbf16, #tpu.memory_space<vmem>>, vector<1x128x128xbf16>
    %7 = vector.shape_cast %6 : vector<1x128x128xbf16> to vector<128x128xbf16>
    %cst = arith.constant dense<0.000000e+00> : vector<8x128xf32>
    %8 = tpu.matmul %4, %7, %cst {dimension_numbers = #tpu.dot_dimension_numbers<[1], [0], [0], [1], [0, 0, 1, 1], [], []>} : vector<8x128xbf16>, vector<128x128xbf16>, vector<8x128xf32> -> vector<8x128xf32>
    %cst_5 = arith.constant 0.000000e+00 : f32
    %9 = vector.broadcast %cst_5 : f32 to vector<8x128xf32>
    %10 = arith.maximumf %8, %9 : vector<8x128xf32>
    %c1_i32 = arith.constant 1 : i32
    %11 = arith.truncf %10 : vector<8x128xf32> to vector<8x128xbf16>
    %12 = arith.index_cast %c1_i32 : i32 to index
    %c0_6 = arith.constant 0 : index
    %c0_7 = arith.constant 0 : index
    %13 = vector.load %arg3[%12, %c0_6, %c0_7] : memref<2x128x128xbf16, #tpu.memory_space<vmem>>, vector<1x128x128xbf16>
    %14 = vector.shape_cast %13 : vector<1x128x128xbf16> to vector<128x128xbf16>
    %cst_8 = arith.constant dense<0.000000e+00> : vector<8x128xf32>
    %15 = tpu.matmul %11, %14, %cst_8 {dimension_numbers = #tpu.dot_dimension_numbers<[1], [0], [0], [1], [0, 0, 1, 1], [], []>} : vector<8x128xbf16>, vector<128x128xbf16>, vector<8x128xf32> -> vector<8x128xf32>
    %cst_9 = arith.constant 0.000000e+00 : f32
    %16 = vector.broadcast %cst_9 : f32 to vector<8x128xf32>
    %17 = arith.maximumf %15, %16 : vector<8x128xf32>
    %c2_i32 = arith.constant 2 : i32
    %c0_10 = arith.constant 0 : index
    %c0_11 = arith.constant 0 : index
    %18 = vector.load %arg4[%c0_10, %c0_11] : memref<8x128xf32, #tpu.memory_space<vmem>>, vector<8x128xf32>
    tpu.vector_store %arg4[%c0_10, %c0_11], %17 {strides = array<i32>} : memref<8x128xf32, #tpu.memory_space<vmem>>, vector<8x128xf32>,
    return
  }
  func.func @transform_0(%arg0: i32, %arg1: i32) -> (i32, i32) {
    %c0_i32 = arith.constant 0 : i32
    %c0_i32_0 = arith.constant 0 : i32
    return %arg0, %c0_i32 : i32, i32
  }
  func.func @transform_1(%arg0: i32, %arg1: i32) -> (i32, i32, i32) {
    %c0_i32 = arith.constant 0 : i32
    %c0_i32_0 = arith.constant 0 : i32
    %c0_i32_1 = arith.constant 0 : i32
    return %arg1, %c0_i32, %c0_i32_0 : i32, i32, i32
  }
  func.func @transform_2(%arg0: i32, %arg1: i32) -> (i32, i32) {
    %c0_i32 = arith.constant 0 : i32
    %c0_i32_0 = arith.constant 0 : i32
    return %arg0, %c0_i32 : i32, i32
  }
}

</mosaic_0001>

<llo_original>
// kernel: mlp_forward.1
$region0: #{mlp_forward.1}
  #allocation0 [shape = 'u32[]', space=smem, size = 0x4, offset = 0x4, fixed_abs, tag = 'smem constant byte address 0x4 - core index']
  #allocation1 [shape = 'u32[144,128]{1,0:T(1,128)}', space=vmem, size = 0x12000, scoped, tag = 'internal scratch']
  %s0 = inlined_call_operand.hbm [shape: f32[16,128], index: 0, kind: input, shape index: {}]
  %s1 = inlined_call_operand.hbm [shape: bf16[4,128,128], index: 1, kind: input, shape index: {}]
  %s2 = inlined_call_operand.hbm [shape: f32[16,128], index: 2, kind: output, shape index: {}]
  %s3 = sld [smem:[#allocation0]]
  $region53: #{mlp_forward.1} parent=0
    _
  %s5 = ssub.s32 1, %s3
  %s6 = scalar_select 0, %s5, %s3
  $region1: #{mlp_forward.1} parent=0
    #allocation2 [shape = 'u8[8192]{0}', space=vmem, size = 0x2000, scoped, tag = 'input window, operand 0']
    #allocation3 [shape = 's32[2]{0}', space=sflag, size = 0x8, scoped, tag = 'scoped memory for mlp_forward.1']
    #allocation4 [shape = 's32[2]{0}', space=sflag, size = 0x8, scoped, tag = 'scoped memory for mlp_forward.1']
    #allocation5 [shape = 'u8[131072]{0}', space=vmem, size = 0x20000, scoped, tag = 'input window, operand 1']
    #allocation6 [shape = 's32[2]{0}', space=sflag, size = 0x8, scoped, tag = 'scoped memory for mlp_forward.1']
    #allocation7 [shape = 'u8[8192]{0}', space=vmem, size = 0x2000, scoped, tag = 'output window, operand 0']
    %7 = vsyncpa [#allocation3], 0
    %s8 = scalar_lea.sflag [#allocation3], 1
    %9 = vsyncpa %s8, 0
    %10 = vsyncpa [#allocation6], 0
    %s11 = scalar_lea.sflag [#allocation6], 1
    %12 = vsyncpa %s11, 0
    %13 = vsyncpa [#allocation4], 0
    %s14 = scalar_lea.sflag [#allocation4], 1
    %15 = vsyncpa %s14, 0
    loop: start=0, step=1, limit=6
    $region2: #{mlp_forward.1} parent=1 // loop_pre_header
      _
    $region3: #{mlp_forward.1} parent=1 // loop_header
      %s17 = sphi 0, %s21
      %p18 = scmp.ge.s32.totalorder %s17, 6
      %s24 = sphi 0, %s36
      %s25 = sphi 0, %s32
      %s26 = sphi 0, %s24
      %s27 = sphi 0, %s25
      %s28 = sphi 0, %s26
      %s29 = sphi 0, %s27
      %s39 = sphi 0, %s41
      %s42 = sphi 0, %s39
      %s43 = sphi 0, %s42
      %s59 = sphi 0, %s43
      %s65 = sphi 0, %s67
      %s68 = sphi 0, %s65
      %s69 = sphi 0, %s68
      %s85 = sphi 0, %s69
      %s91 = sphi 0, %s93
      %s94 = sphi 0, %s91
      %s95 = sphi 0, %s94
      %s111 = sphi 0, %s95
    $region4: #{mlp_forward.1} parent=1 // loop_header_branch
      %20 = sbr.rel (%p18) target = $region8
    $region5: #{mlp_forward.1} parent=1 // loop_body
      %s22 = ssub.s32 %s17, 1
      %s23 = ssub.s32 %s17, 2
      %s30 = sadd.s32 1, %s25
      %p31 = scmp.ge.s32.totalorder %s30, 2
      %s32 = scalar_select %p31, 0, %s30
      %s33 = sadd.s32 1, %s24
      %s34 = scalar_select %p31, %s33, %s24
      %p35 = scmp.ge.s32.totalorder %s34, 2
      %s36 = scalar_select %p35, 0, %s34
      %s37 = ssub.s32 %s24, %s36
      %p38 = scmp.eq.s32.totalorder %s37, 0
      %s40 = sadd.s32 %s39, 1
      %s41 = scalar_select %p38, %s39, %s40
      %p44 = pneg %p38
      %p45 = scmp.eq.s32.totalorder %s17, 3
      %p46 = por %p44, %p45
      %p47 = scmp.ne.s32.totalorder %s39, %s42
      %p48 = scmp.eq.s32.totalorder %s17, 0
      %p49 = por %p47, %p48
      %p50 = scmp.ne.s32.totalorder %s39, %s42
      %p51 = scmp.eq.s32.totalorder %s22, 3
      %p52 = por %p50, %p51
      %p53 = scmp.ne.s32.totalorder %s42, %s43
      %p54 = scmp.eq.s32.totalorder %s22, 0
      %p55 = por %p53, %p54
      %p56 = scmp.ne.s32.totalorder %s42, %s43
      %p57 = scmp.eq.s32.totalorder %s23, 3
      %p58 = por %p56, %p57
      %p60 = scmp.ne.s32.totalorder %s43, %s59
      %p61 = scmp.eq.s32.totalorder %s23, 0
      %p62 = por %p60, %p61
      %s63 = ssub.s32 %s25, %s32
      %p64 = scmp.eq.s32.totalorder %s63, 0
      %s66 = sadd.s32 %s65, 1
      %s67 = scalar_select %p64, %s65, %s66
      %p70 = pneg %p64
      %p71 = scmp.eq.s32.totalorder %s17, 3
      %p72 = por %p70, %p71
      %p73 = scmp.ne.s32.totalorder %s65, %s68
      %p74 = scmp.eq.s32.totalorder %s17, 0
      %p75 = por %p73, %p74
      %p76 = scmp.ne.s32.totalorder %s65, %s68
      %p77 = scmp.eq.s32.totalorder %s22, 3
      %p78 = por %p76, %p77
      %p79 = scmp.ne.s32.totalorder %s68, %s69
      %p80 = scmp.eq.s32.totalorder %s22, 0
      %p81 = por %p79, %p80
      %p82 = scmp.ne.s32.totalorder %s68, %s69
      %p83 = scmp.eq.s32.totalorder %s23, 3
      %p84 = por %p82, %p83
      %p86 = scmp.ne.s32.totalorder %s69, %s85
      %p87 = scmp.eq.s32.totalorder %s23, 0
      %p88 = por %p86, %p87
      %s89 = ssub.s32 %s24, %s36
      %p90 = scmp.eq.s32.totalorder %s89, 0
      %s92 = sadd.s32 %s91, 1
      %s93 = scalar_select %p90, %s91, %s92
      %p96 = pneg %p90
      %p97 = scmp.eq.s32.totalorder %s17, 3
      %p98 = por %p96, %p97
      %p99 = scmp.ne.s32.totalorder %s91, %s94
      %p100 = scmp.eq.s32.totalorder %s17, 0
      %p101 = por %p99, %p100
      %p102 = scmp.ne.s32.totalorder %s91, %s94
      %p103 = scmp.eq.s32.totalorder %s22, 3
      %p104 = por %p102, %p103
      %p105 = scmp.ne.s32.totalorder %s94, %s95
      %p106 = scmp.eq.s32.totalorder %s22, 0
      %p107 = por %p105, %p106
      %p108 = scmp.ne.s32.totalorder %s94, %s95
      %p109 = scmp.eq.s32.totalorder %s23, 3
      %p110 = por %p108, %p109
      %p112 = scmp.ne.s32.totalorder %s95, %s111
      %p113 = scmp.eq.s32.totalorder %s23, 0
      %p114 = por %p112, %p113
      %p115 = scmp.le.s32.totalorder 1, %s17
      %p116 = scmp.lt.s32.totalorder %s17, 5
      %p117 = pnand %p115, %p116
      %p118 = pneg %p117
      // Predicated region
      $region9: #{mlp_forward.1} parent=5 // pred_check
        _
      $region10: #{mlp_forward.1} parent=5 // pred_check_branch
        %120 = sbr.rel (%p117) target = $region12
      $region11: #{mlp_forward.1} parent=5 // pred_region
        %s121 = ssub.s32 %s17, 1
      $region12: #{mlp_forward.1} parent=5 // pred_fallthru
        _
      %p122 = scmp.lt.s32.totalorder %s17, 4
      // Predicated region
      $region13: #{mlp_forward.1} parent=5 // pred_check
        %p123 = pneg %p122
      $region14: #{mlp_forward.1} parent=5 // pred_check_branch
        %125 = sbr.rel (%p123) target = $region16
      $region15: #{mlp_forward.1} parent=5 // pred_region
        // Predicated region
        $region17: #{mlp_forward.1} parent=15 // pred_check
          %p126 = pneg %p49
        $region18: #{mlp_forward.1} parent=15 // pred_check_branch
          %128 = sbr.rel (%p126) target = $region20
        $region19: #{mlp_forward.1} parent=15 // pred_region
          %s129 = sand.u32 %s39, 1
          %s130 = scalar_lea.sflag [#allocation3], %s129
          %s131 = sand.u32 %s39, 1
          %s132 = smul.addr %s131, 8
          %s133 = scalar_lea.vmem [#allocation2], %s132
          %s135 = ssub.s32 128, 128
          %136 = vsyncadd %s130, %s135
          %s137 = smul.addr %s24, 128
          %s138 = scalar_lea.hbm %s0, %s137
          %s140 = sshll.u32 %s133, 4
          %s141 = int_to_ptr.vmem [resolvable:$true] %s140
          %143 = dma.hbm_to_vmem [thread:$0]  %s138, 128, %s141, %s130
        $region20: #{mlp_forward.1} parent=15 // pred_fallthru
          _
        // Predicated region
        $region21: #{mlp_forward.1} parent=15 // pred_check
          %p144 = pneg %p75
        $region22: #{mlp_forward.1} parent=15 // pred_check_branch
          %146 = sbr.rel (%p144) target = $region24
        $region23: #{mlp_forward.1} parent=15 // pred_region
          %s147 = sand.u32 %s65, 1
          %s148 = scalar_lea.sflag [#allocation6], %s147
          %s149 = sand.u32 %s65, 1
          %s150 = smul.addr %s149, 128
          %s151 = scalar_lea.vmem [#allocation5], %s150
          %s152 = smul.u32 2, %s25
          %s154 = ssub.s32 2048, 2048
          %155 = vsyncadd %s148, %s154
          %s156 = smul.addr %s152, 16
          %s157 = smul.addr %s156, 64
          %s158 = scalar_lea.hbm %s1, %s157
          %s159 = sshll.u32 %s151, 4
          %s160 = int_to_ptr.vmem [resolvable:$true] %s159
          %165 = dma.hbm_to_vmem [thread:$0]  %s158, 2048, %s160, %s148, 64, 64, 4
        $region24: #{mlp_forward.1} parent=15 // pred_fallthru
          _
      $region16: #{mlp_forward.1} parent=5 // pred_fallthru
        _
      %p166 = scmp.le.s32.totalorder 1, %s17
      %p167 = scmp.lt.s32.totalorder %s17, 5
      %p168 = pnand %p166, %p167
      %p169 = pneg %p168
      // Predicated region
      $region25: #{mlp_forward.1} parent=5 // pred_check
        _
      $region26: #{mlp_forward.1} parent=5 // pred_check_branch
        %171 = sbr.rel (%p168) target = $region28
      $region27: #{mlp_forward.1} parent=5 // pred_region
        %s172 = ssub.s32 %s17, 1
        %s173 = sand.u32 %s42, 1
        %s174 = scalar_lea.sflag [#allocation3], %s173
        %s175 = sand.u32 %s42, 1
        %s176 = smul.addr %s175, 8
        %s177 = scalar_lea.vmem [#allocation2], %s176
        // Predicated region
        $region29: #{mlp_forward.1} parent=27 // pred_check
          %p178 = pneg %p55
        $region30: #{mlp_forward.1} parent=27 // pred_check_branch
          %180 = sbr.rel (%p178) target = $region32
        $region31: #{mlp_forward.1} parent=27 // pred_region
          %181 = dma.done %s174, 128
        $region32: #{mlp_forward.1} parent=27 // pred_fallthru
          _
        %s182 = sand.u32 %s68, 1
        %s183 = scalar_lea.sflag [#allocation6], %s182
        %s184 = sand.u32 %s68, 1
        %s185 = smul.addr %s184, 128
        %s186 = scalar_lea.vmem [#allocation5], %s185
        // Predicated region
        $region33: #{mlp_forward.1} parent=27 // pred_check
          %p187 = pneg %p81
        $region34: #{mlp_forward.1} parent=27 // pred_check_branch
          %189 = sbr.rel (%p187) target = $region36
        $region35: #{mlp_forward.1} parent=27 // pred_region
          %190 = dma.done %s183, 2048
        $region36: #{mlp_forward.1} parent=27 // pred_fallthru
          _
        %s191 = sand.u32 %s42, 1
        %s192 = scalar_lea.sflag [#allocation3], %s191
        %s193 = sand.u32 %s42, 1
        %s194 = smul.addr %s193, 8
        %s195 = scalar_lea.vmem [#allocation2], %s194
        %p196 = pneg %p55
        %p197 = pneg %p52
        %s198 = sand.u32 %s68, 1
        %s199 = scalar_lea.sflag [#allocation6], %s198
        %s200 = sand.u32 %s68, 1
        %s201 = smul.addr %s200, 128
        %s202 = scalar_lea.vmem [#allocation5], %s201
        %p203 = pneg %p81
        %p204 = pneg %p78
        %p205 = pneg %p107
        %p206 = pneg %p104
        %s207 = sand.u32 %s94, 1
        %s208 = scalar_lea.sflag [#allocation4], %s207
        %s209 = sand.u32 %s94, 1
        %s210 = smul.addr %s209, 8
        %s211 = scalar_lea.vmem [#allocation7], %s210
        %s212 = smul.u32 2, %s27
        %p214 = scmp.eq.s32.totalorder %s27, 0
        // Predicated region
        $region37: #{mlp_forward.1} parent=27 // pred_check
          %p215 = pneg %p214
        $region38: #{mlp_forward.1} parent=27 // pred_check_branch
          %217 = sbr.rel (%p215) target = $region40
        $region39: #{mlp_forward.1} parent=27 // pred_region
          %v218 = vld [vmem:[%s177] sm:$0xff]
          %219 = vst [vmem:[%s211] sm:$0xff] %v218
        $region40: #{mlp_forward.1} parent=27 // pred_fallthru
          _
        %v220 = vld [vmem:[%s211] sm:$0xff]
        %v221 = vpack.c.bf16 %v220, %v220
        %v222 = vld [vmem:[%s186] sm:$0xf]
        %v223 = vld [vmem:[%s186 + $0x4] sm:$0xf]
        %v224 = vld [vmem:[%s186 + $0x8] sm:$0xf]
        %v225 = vld [vmem:[%s186 + $0xc] sm:$0xf]
        %v226 = vld [vmem:[%s186 + $0x10] sm:$0xf]
        %v227 = vld [vmem:[%s186 + $0x14] sm:$0xf]
        %v228 = vld [vmem:[%s186 + $0x18] sm:$0xf]
        %v229 = vld [vmem:[%s186 + $0x1c] sm:$0xf]
        %v230 = vld [vmem:[%s186 + $0x20] sm:$0xf]
        %v231 = vld [vmem:[%s186 + $0x24] sm:$0xf]
        %v232 = vld [vmem:[%s186 + $0x28] sm:$0xf]
        %v233 = vld [vmem:[%s186 + $0x2c] sm:$0xf]
        %v234 = vld [vmem:[%s186 + $0x30] sm:$0xf]
        %v235 = vld [vmem:[%s186 + $0x34] sm:$0xf]
        %v236 = vld [vmem:[%s186 + $0x38] sm:$0xf]
        %v237 = vld [vmem:[%s186 + $0x3c] sm:$0xf]
        %v254 = vunpack.c.l.b16 %v222
        %v255 = vunpack.c.l.b16 %v223
        %v256 = vunpack.c.l.b16 %v224
        %v257 = vunpack.c.l.b16 %v225
        %v258 = vunpack.c.l.b16 %v226
        %v259 = vunpack.c.l.b16 %v227
        %v260 = vunpack.c.l.b16 %v228
        %v261 = vunpack.c.l.b16 %v229
        %v262 = vunpack.c.l.b16 %v230
        %v263 = vunpack.c.l.b16 %v231
        %v264 = vunpack.c.l.b16 %v232
        %v265 = vunpack.c.l.b16 %v233
        %v266 = vunpack.c.l.b16 %v234
        %v267 = vunpack.c.l.b16 %v235
        %v268 = vunpack.c.l.b16 %v236
        %v269 = vunpack.c.l.b16 %v237
        %v270 = vpack.c.b16 %v255, %v254
        %v271 = vpack.c.b16 %v257, %v256
        %v272 = vpack.c.b16 %v259, %v258
        %v273 = vpack.c.b16 %v261, %v260
        %v274 = vpack.c.b16 %v263, %v262
        %v275 = vpack.c.b16 %v265, %v264
        %v276 = vpack.c.b16 %v267, %v266
        %v277 = vpack.c.b16 %v269, %v268
        %286 = vmatprep.subr.bf16.mxu0 0
        %287 = vmatpush1.bf16.msra.mxu0 %v270
        %288 = vmatprep.subr.bf16.mxu0 0
        %289 = vmatpush1.bf16.msra.mxu0 %v271
        %290 = vmatprep.subr.bf16.mxu0 0
        %291 = vmatpush1.bf16.msra.mxu0 %v272
        %292 = vmatprep.subr.bf16.mxu0 0
        %293 = vmatpush1.bf16.msra.mxu0 %v273
        %294 = vmatprep.subr.bf16.mxu0 0
        %295 = vmatpush1.bf16.msra.mxu0 %v274
        %296 = vmatprep.subr.bf16.mxu0 0
        %297 = vmatpush1.bf16.msra.mxu0 %v275
        %298 = vmatprep.subr.bf16.mxu0 0
        %299 = vmatpush1.bf16.msra.mxu0 %v276
        %300 = vmatprep.subr.bf16.mxu0 0
        %301 = vmatpush1.bf16.msra.mxu0 %v277
        %302 = vmatprep.subr.bf16.mxu0 0
        %303 = vmatpush1.bf16.msra.mxu0 0
        %304 = vmatprep.subr.bf16.mxu0 0
        %305 = vmatpush1.bf16.msra.mxu0 0
        %306 = vmatprep.subr.bf16.mxu0 0
        %307 = vmatpush1.bf16.msra.mxu0 0
        %308 = vmatprep.subr.bf16.mxu0 0
        %309 = vmatpush1.bf16.msra.mxu0 0
        %310 = vmatprep.subr.bf16.mxu0 0
        %311 = vmatpush1.bf16.msra.mxu0 0
        %312 = vmatprep.subr.bf16.mxu0 0
        %313 = vmatpush1.bf16.msra.mxu0 0
        %314 = vmatprep.subr.bf16.mxu0 0
        %315 = vmatpush1.bf16.msra.mxu0 0
        %316 = vmatprep.subr.bf16.mxu0 0
        %317 = vmatpush1.bf16.msra.mxu0 0
        %318 = vmatprep.mubr.bf16.mxu0 0
        %319 = vmatmul.mubr.bf16.gmra.mrb[0].mxu0 %v221
        %v320 = vpop.f32.mrb[0].mxu0
        %v321 = vadd.f32 0.0, %v320
        %v322 = vpop.f32.mrb[0].mxu0
        %v323 = vpop.f32.mrb[0].mxu0
        %v324 = vpop.f32.mrb[0].mxu0
        %325 = vdwg.mxu0
        %v326 = vmax.f32 %v321, 0.0
        %v327 = vpack.c.bf16 %v326, %v326
        %s328 = scalar_lea.vmem %s186, 64 [#allocation5]
        %v329 = vld [vmem:[%s328] sm:$0xf]
        %v330 = vld [vmem:[%s328 + $0x4] sm:$0xf]
        %v331 = vld [vmem:[%s328 + $0x8] sm:$0xf]
        %v332 = vld [vmem:[%s328 + $0xc] sm:$0xf]
        %v333 = vld [vmem:[%s328 + $0x10] sm:$0xf]
        %v334 = vld [vmem:[%s328 + $0x14] sm:$0xf]
        %v335 = vld [vmem:[%s328 + $0x18] sm:$0xf]
        %v336 = vld [vmem:[%s328 + $0x1c] sm:$0xf]
        %v337 = vld [vmem:[%s328 + $0x20] sm:$0xf]
        %v338 = vld [vmem:[%s328 + $0x24] sm:$0xf]
        %v339 = vld [vmem:[%s328 + $0x28] sm:$0xf]
        %v340 = vld [vmem:[%s328 + $0x2c] sm:$0xf]
        %v341 = vld [vmem:[%s328 + $0x30] sm:$0xf]
        %v342 = vld [vmem:[%s328 + $0x34] sm:$0xf]
        %v343 = vld [vmem:[%s328 + $0x38] sm:$0xf]
        %v344 = vld [vmem:[%s328 + $0x3c] sm:$0xf]
        %v361 = vunpack.c.l.b16 %v329
        %v362 = vunpack.c.l.b16 %v330
        %v363 = vunpack.c.l.b16 %v331
        %v364 = vunpack.c.l.b16 %v332
        %v365 = vunpack.c.l.b16 %v333
        %v366 = vunpack.c.l.b16 %v334
        %v367 = vunpack.c.l.b16 %v335
        %v368 = vunpack.c.l.b16 %v336
        %v369 = vunpack.c.l.b16 %v337
        %v370 = vunpack.c.l.b16 %v338
        %v371 = vunpack.c.l.b16 %v339
        %v372 = vunpack.c.l.b16 %v340
        %v373 = vunpack.c.l.b16 %v341
        %v374 = vunpack.c.l.b16 %v342
        %v375 = vunpack.c.l.b16 %v343
        %v376 = vunpack.c.l.b16 %v344
        %v377 = vpack.c.b16 %v362, %v361
        %v378 = vpack.c.b16 %v364, %v363
        %v379 = vpack.c.b16 %v366, %v365
        %v380 = vpack.c.b16 %v368, %v367
        %v381 = vpack.c.b16 %v370, %v369
        %v382 = vpack.c.b16 %v372, %v371
        %v383 = vpack.c.b16 %v374, %v373
        %v384 = vpack.c.b16 %v376, %v375
        %393 = vmatprep.subr.bf16.mxu0 0
        %394 = vmatpush1.bf16.msra.mxu0 %v377
        %395 = vmatprep.subr.bf16.mxu0 0
        %396 = vmatpush1.bf16.msra.mxu0 %v378
        %397 = vmatprep.subr.bf16.mxu0 0
        %398 = vmatpush1.bf16.msra.mxu0 %v379
        %399 = vmatprep.subr.bf16.mxu0 0
        %400 = vmatpush1.bf16.msra.mxu0 %v380
        %401 = vmatprep.subr.bf16.mxu0 0
        %402 = vmatpush1.bf16.msra.mxu0 %v381
        %403 = vmatprep.subr.bf16.mxu0 0
        %404 = vmatpush1.bf16.msra.mxu0 %v382
        %405 = vmatprep.subr.bf16.mxu0 0
        %406 = vmatpush1.bf16.msra.mxu0 %v383
        %407 = vmatprep.subr.bf16.mxu0 0
        %408 = vmatpush1.bf16.msra.mxu0 %v384
        %409 = vmatprep.subr.bf16.mxu0 0
        %410 = vmatpush1.bf16.msra.mxu0 0
        %411 = vmatprep.subr.bf16.mxu0 0
        %412 = vmatpush1.bf16.msra.mxu0 0
        %413 = vmatprep.subr.bf16.mxu0 0
        %414 = vmatpush1.bf16.msra.mxu0 0
        %415 = vmatprep.subr.bf16.mxu0 0
        %416 = vmatpush1.bf16.msra.mxu0 0
        %417 = vmatprep.subr.bf16.mxu0 0
        %418 = vmatpush1.bf16.msra.mxu0 0
        %419 = vmatprep.subr.bf16.mxu0 0
        %420 = vmatpush1.bf16.msra.mxu0 0
        %421 = vmatprep.subr.bf16.mxu0 0
        %422 = vmatpush1.bf16.msra.mxu0 0
        %423 = vmatprep.subr.bf16.mxu0 0
        %424 = vmatpush1.bf16.msra.mxu0 0
        %425 = vmatprep.mubr.bf16.mxu0 0
        %426 = vmatmul.mubr.bf16.gmra.mrb[0].mxu0 %v327
        %v427 = vpop.f32.mrb[0].mxu0
        %v428 = vadd.f32 0.0, %v427
        %v429 = vpop.f32.mrb[0].mxu0
        %v430 = vpop.f32.mrb[0].mxu0
        %v431 = vpop.f32.mrb[0].mxu0
        %432 = vdwg.mxu0
        %v433 = vmax.f32 %v428, 0.0
        %434 = vst [vmem:[%s211] sm:$0xff] %v433
        %s435 = sand.u32 %s94, 1
        %s436 = scalar_lea.sflag [#allocation4], %s435
        %s437 = sand.u32 %s94, 1
        %s438 = smul.addr %s437, 8
        %s439 = scalar_lea.vmem [#allocation7], %s438
        // Predicated region
        $region41: #{mlp_forward.1} parent=27 // pred_check
          %p440 = pneg %p104
        $region42: #{mlp_forward.1} parent=27 // pred_check_branch
          %442 = sbr.rel (%p440) target = $region44
        $region43: #{mlp_forward.1} parent=27 // pred_region
          %s444 = ssub.s32 128, 128
          %445 = vsyncadd %s436, %s444
          %s446 = smul.addr %s26, 128
          %s447 = scalar_lea.hbm %s2, %s446
          %s449 = sshll.u32 %s439, 4
          %s450 = int_to_ptr.vmem [resolvable:$true] %s449
          %452 = dma.vmem_to_hbm [thread:$0]  %s450, 128, %s447, %s436
        $region44: #{mlp_forward.1} parent=27 // pred_fallthru
          _
      $region28: #{mlp_forward.1} parent=5 // pred_fallthru
        _
      %p453 = scmp.le.s32.totalorder 2, %s17
      // Predicated region
      $region45: #{mlp_forward.1} parent=5 // pred_check
        %p454 = pneg %p453
      $region46: #{mlp_forward.1} parent=5 // pred_check_branch
        %456 = sbr.rel (%p454) target = $region48
      $region47: #{mlp_forward.1} parent=5 // pred_region
        %s457 = ssub.s32 %s17, 2
        // Predicated region
        $region49: #{mlp_forward.1} parent=47 // pred_check
          %p458 = pneg %p110
        $region50: #{mlp_forward.1} parent=47 // pred_check_branch
          %460 = sbr.rel (%p458) target = $region52
        $region51: #{mlp_forward.1} parent=47 // pred_region
          %s461 = sand.u32 %s95, 1
          %s462 = scalar_lea.sflag [#allocation4], %s461
          %s463 = sand.u32 %s95, 1
          %s464 = smul.addr %s463, 8
          %s465 = scalar_lea.vmem [#allocation7], %s464
          %466 = dma.done %s462, 128
        $region52: #{mlp_forward.1} parent=47 // pred_fallthru
          _
      $region48: #{mlp_forward.1} parent=5 // pred_fallthru
        _
    $region6: #{mlp_forward.1} parent=1 // loop_footer
      %s21 = sadd.s32 1, %s17
    $region7: #{mlp_forward.1} parent=1 // loop_footer_branch
      %16 = sbr.rel target = $region3
    $region8: #{mlp_forward.1} parent=1 // loop_exit
      _
    %467 = vsyncpa [#allocation3], 1
    %s468 = scalar_lea.sflag [#allocation3], 1
    %469 = vsyncpa %s468, 1
    %470 = vsyncpa [#allocation6], 1
    %s471 = scalar_lea.sflag [#allocation6], 1
    %472 = vsyncpa %s471, 1
    %473 = vsyncpa [#allocation4], 1
    %s474 = scalar_lea.sflag [#allocation4], 1
    %475 = vsyncpa %s474, 1

</llo_original>
